<compile_context>
chip_gen: v7x
topology: tpu7x:2x2x1
jax: 0.10.0
libtpu: 0.0.40
codegen_flags: <defaults>
</compile_context>

<pallas_src>
import functools

import numpy as np
import jax
import jax.numpy as jnp
from jax.experimental import pallas as pl
from jax.experimental.pallas import tpu as pltpu

MXU_DTYPE = jnp.bfloat16  # MXU operand dtype; accumulation / LN / softmax stay f32


# ------------------------- in-kernel math helpers ---------------------------

def _mm(a, b):
    """MXU matmul: bf16 operands, f32 accumulation."""
    return jnp.dot(a.astype(MXU_DTYPE), b.astype(MXU_DTYPE),
                   preferred_element_type=jnp.float32)


def _mm_nt(a, b):
    """a @ b.T without an explicit transpose (contract last dims of both)."""
    return jax.lax.dot_general(
        a.astype(MXU_DTYPE), b.astype(MXU_DTYPE),
        dimension_numbers=(((1,), (1,)), ((), ())),
        preferred_element_type=jnp.float32)


def _silu(x):
    return x * jax.nn.sigmoid(x)


def _mlp(x, w1, b1, w2, b2, gamma=None, beta=None):
    h = _silu(_mm(x, w1) + b1)
    y = _mm(h, w2) + b2
    if gamma is not None:  # LayerNorm (f32)
        mu = jnp.mean(y, axis=-1, keepdims=True)
        var = jnp.mean(jnp.square(y - mu), axis=-1, keepdims=True)
        y = (y - mu) * jax.lax.rsqrt(var + 1e-5)
        y = y * gamma + beta
    return y


def _cond_ln(x, sc, sh):
    mu = jnp.mean(x, axis=-1, keepdims=True)
    var = jnp.mean(jnp.square(x - mu), axis=-1, keepdims=True)
    xn = (x - mu) * jax.lax.rsqrt(var + 1e-5)
    return xn * (1.0 + sc) + sh


# ----------------------------- Pallas kernels ------------------------------

def _mlp_kernel(x_ref, *refs, use_ln):
    o_ref = refs[-1]
    w1, b1, w2, b2 = (r[...] for r in refs[:4])
    g = refs[4][...] if use_ln else None
    bt = refs[5][...] if use_ln else None
    o_ref[...] = _mlp(x_ref[...], w1, b1, w2, b2, g, bt)


def _grid_encoder_kernel(x_ref,
                         ew1, eb1, ew2, eb2, eg, ebt,
                         uw1, ub1, uw2, ub2, ug, ubt,
                         emb_ref, lat_ref):
    emb = _mlp(x_ref[...], ew1[...], eb1[...], ew2[...], eb2[...], eg[...], ebt[...])
    upd = _mlp(emb, uw1[...], ub1[...], uw2[...], ub2[...], ug[...], ubt[...])
    emb_ref[...] = emb
    lat_ref[...] = emb + upd


def _g2m_kernel(msg_ref, agg_ref, memb_ref,
                mw1, mb1, mw2, mb2, mg, mbt,
                uw1, ub1, uw2, ub2, ug, ubt,
                o_ref, *, scale):
    # message MLP over edges, one-hot aggregation to mesh nodes, residual update
    msgs = _mlp(msg_ref[0], mw1[...], mb1[...], mw2[...], mb2[...], mg[...], mbt[...])
    aggm = _mm(agg_ref[...], msgs)                       # (n_mesh, d)
    memb = memb_ref[...]
    upd = _mlp(jnp.concatenate([memb, aggm], axis=-1),
               uw1[...], ub1[...], uw2[...], ub2[...], ug[...], ubt[...])
    o_ref[0] = memb + scale * upd


def _m2g_kernel(msg_ref, grid_ref, agg_ref,
                mw1, mb1, mw2, mb2, mg, mbt,
                uw1, ub1, uw2, ub2, ug, ubt,
                ow1, ob1, ow2, ob2,
                o_ref):
    msgs = _mlp(msg_ref[0], mw1[...], mb1[...], mw2[...], mb2[...], mg[...], mbt[...])
    aggg = _mm(agg_ref[...], msgs)                       # (n_grid, d)
    g = grid_ref[0]
    upd = _mlp(jnp.concatenate([g, aggg], axis=-1),
               uw1[...], ub1[...], uw2[...], ub2[...], ug[...], ubt[...])
    gu = g + upd
    o_ref[0] = _mlp(gu, ow1[...], ob1[...], ow2[...], ob2[...], None, None)


def _processor_kernel(x_ref, nz_ref, mask_ref,
                      nw1, nb1, nw2, nb2,
                      mod_w, mod_b, qkv_w, qkv_b, ow, ob,
                      mw1, mb1, mw2, mb2,
                      o_ref, *, num_blocks, num_heads, head_dim, latent):
    d = latent
    x = x_ref[0]                                          # (n_mesh, d)
    nz = nz_ref[0]                                        # (1, noise_dim)
    nemb = _mlp(nz, nw1[...], nb1[...], nw2[...], nb2[...], None, None)   # (1, d)
    mask = mask_ref[...] > 0.5
    scale = 1.0 / float(head_dim) ** 0.5
    for blk in range(num_blocks):
        mod = _mm(nemb, mod_w[blk]) + mod_b[blk]          # (1, 4d), broadcast over rows
        sh1, sc1 = mod[:, 0:d], mod[:, d:2 * d]
        sh2, sc2 = mod[:, 2 * d:3 * d], mod[:, 3 * d:4 * d]
        xn = _cond_ln(x, sc1, sh1)
        qkv = _mm(xn, qkv_w[blk]) + qkv_b[blk]            # (n_mesh, 3d)
        heads = []
        for h in range(num_heads):
            q = qkv[:, h * head_dim:(h + 1) * head_dim]
            k = qkv[:, d + h * head_dim:d + (h + 1) * head_dim]
            v = qkv[:, 2 * d + h * head_dim:2 * d + (h + 1) * head_dim]
            s = _mm_nt(q, k) * scale
            s = jnp.where(mask, s, -1e30)
            s = s - jnp.max(s, axis=-1, keepdims=True)
            p = jnp.exp(s)
            p = p * pl.reciprocal(jnp.sum(p, axis=-1, keepdims=True), approx=True)
            heads.append(_mm(p, v))
        a = jnp.concatenate(heads, axis=-1)               # (n_mesh, d)
        x = x + _mm(a, ow[blk]) + ob[blk]
        xn2 = _cond_ln(x, sc2, sh2)
        hh = _silu(_mm(xn2, mw1[blk]) + mb1[blk])
        x = x + _mm(hh, mw2[blk]) + mb2[blk]
    o_ref[0] = x


# ----------------------------- Pallas wrappers ------------------------------

def _const_spec(a):
    nd = a.ndim
    return pl.BlockSpec(a.shape, lambda i, _nd=nd: (0,) * _nd)


def _mlp_args(p, use_ln=True):
    args = [p["w1"], p["b1"], p["w2"], p["b2"]]
    if use_ln:
        args += [p["gamma"], p["beta"]]
    return args


def _parallel():
    return pltpu.CompilerParams(dimension_semantics=("parallel",))


def _row_tiling(rows, max_tile=512):
    if rows >= max_tile:
        tile = max_tile
    else:
        tile = max(8, ((rows + 127) // 128) * 128)
    padded = ((rows + tile - 1) // tile) * tile
    return tile, padded


def pallas_mlp(x, p, use_ln=True):
    """Small one-shot MLP (used once at init for static graph embeddings)."""
    rows = x.shape[0]
    dout = p["w2"].shape[1]
    consts = _mlp_args(p, use_ln)
    return pl.pallas_call(
        functools.partial(_mlp_kernel, use_ln=use_ln),
        out_shape=jax.ShapeDtypeStruct((rows, dout), jnp.float32),
        grid=(1,),
        in_specs=[_const_spec(x)] + [_const_spec(a) for a in consts],
        out_specs=pl.BlockSpec((rows, dout), lambda i: (0, 0)),
        compiler_params=_parallel(),
    )(x.astype(jnp.float32), *consts)


def run_grid_encoder(grid_in, p_embed, p_upd):
    rows, din = grid_in.shape
    d = p_embed["w2"].shape[1]
    tile, padded = _row_tiling(rows)
    x = grid_in
    if padded != rows:
        x = jnp.pad(x, ((0, padded - rows), (0, 0)))
    consts = _mlp_args(p_embed) + _mlp_args(p_upd)
    emb, lat = pl.pallas_call(
        _grid_encoder_kernel,
        out_shape=(jax.ShapeDtypeStruct((padded, d), jnp.float32),
                   jax.ShapeDtypeStruct((padded, d), jnp.float32)),
        grid=(padded // tile,),
        in_specs=[pl.BlockSpec((tile, din), lambda i: (i, 0))]
                 + [_const_spec(a) for a in consts],
        out_specs=(pl.BlockSpec((tile, d), lambda i: (i, 0)),
                   pl.BlockSpec((tile, d), lambda i: (i, 0))),
        compiler_params=_parallel(),
    )(x, *consts)
    return emb[:rows], lat[:rows]


def run_g2m_encoder(msg_in, agg, mesh_emb, p_msg, p_upd, scale):
    b, e, dm = msg_in.shape
    nm, d = mesh_emb.shape
    consts = [agg, mesh_emb] + _mlp_args(p_msg) + _mlp_args(p_upd)
    return pl.pallas_call(
        functools.partial(_g2m_kernel, scale=scale),
        out_shape=jax.ShapeDtypeStruct((b, nm, d), jnp.float32),
        grid=(b,),
        in_specs=[pl.BlockSpec((1, e, dm), lambda i: (i, 0, 0))]
                 + [_const_spec(a) for a in consts],
        out_specs=pl.BlockSpec((1, nm, d), lambda i: (i, 0, 0)),
        compiler_params=_parallel(),
    )(msg_in, *consts)


def run_m2g_decoder(msg_in, grid_lat, agg, p_msg, p_upd, p_out):
    bE, e, dm = msg_in.shape
    _, ng, d = grid_lat.shape
    fo = p_out["w2"].shape[1]
    consts = [agg] + _mlp_args(p_msg) + _mlp_args(p_upd) + _mlp_args(p_out, use_ln=False)
    return pl.pallas_call(
        _m2g_kernel,
        out_shape=jax.ShapeDtypeStruct((bE, ng, fo), jnp.float32),
        grid=(bE,),
        in_specs=[pl.BlockSpec((1, e, dm), lambda i: (i, 0, 0)),
                  pl.BlockSpec((1, ng, d), lambda i: (i, 0, 0))]
                 + [_const_spec(a) for a in consts],
        out_specs=pl.BlockSpec((1, ng, fo), lambda i: (i, 0, 0)),
        compiler_params=_parallel(),
    )(msg_in, grid_lat, *consts)


def run_processor(x, noise, mask, p_noise, blk, *, num_blocks, num_heads, head_dim):
    bE, nm, d = x.shape
    nd = noise.shape[-1]
    consts = ([mask] + _mlp_args(p_noise, use_ln=False)
              + [blk["mod_w"], blk["mod_b"], blk["qkv_w"], blk["qkv_b"],
                 blk["out_w"], blk["out_b"], blk["mlp_w1"], blk["mlp_b1"],
                 blk["mlp_w2"], blk["mlp_b2"]])
    return pl.pallas_call(
        functools.partial(_processor_kernel, num_blocks=num_blocks,
                          num_heads=num_heads, head_dim=head_dim, latent=d),
        out_shape=jax.ShapeDtypeStruct((bE, nm, d), jnp.float32),
        grid=(bE,),
        in_specs=[pl.BlockSpec((1, nm, d), lambda i: (i, 0, 0)),
                  pl.BlockSpec((1, 1, nd), lambda i: (i, 0, 0))]
                 + [_const_spec(a) for a in consts],
        out_specs=pl.BlockSpec((1, nm, d), lambda i: (i, 0, 0)),
        compiler_params=_parallel(),
    )(x, noise, *consts)


# ----------------------------- Parameter init -------------------------------

def init_linear(key, din, dout):
    w = jax.random.normal(key, (din, dout), jnp.float32) / np.sqrt(din)
    b = jnp.zeros((1, dout), jnp.float32)
    return w, b


def init_mlp(key, din, dh, dout, use_ln=True):
    k1, k2 = jax.random.split(key)
    w1, b1 = init_linear(k1, din, dh)
    w2, b2 = init_linear(k2, dh, dout)
    p = {"w1": w1, "b1": b1, "w2": w2, "b2": b2}
    if use_ln:
        p["gamma"] = jnp.ones((1, dout), jnp.float32)
        p["beta"] = jnp.zeros((1, dout), jnp.float32)
    return p


# ----------------------------- Synthetic graphs -----------------------------

def _knn_edges(src_xyz, dst_xyz, k):
    d = np.linalg.norm(dst_xyz[:, None, :] - src_xyz[None, :, :], axis=-1)
    nn = np.argsort(d, axis=-1)[:, :k]
    senders = nn.reshape(-1).astype(np.int32)
    receivers = np.repeat(np.arange(dst_xyz.shape[0]), k).astype(np.int32)
    disp = src_xyz[senders] - dst_xyz[receivers]
    length = np.linalg.norm(disp, axis=-1, keepdims=True)
    attr = np.concatenate([disp, length], axis=-1).astype(np.float32)
    return senders, receivers, attr


def _build_synthetic_graphs(grid_lon, grid_lat, n_mesh):
    lon2, lat2 = np.meshgrid(grid_lon, grid_lat, indexing="ij")  # (n_lon, n_lat)
    lon = np.deg2rad(lon2.reshape(-1))
    lat = np.deg2rad(lat2.reshape(-1))
    grid_xyz = np.stack(
        [np.cos(lat) * np.cos(lon), np.cos(lat) * np.sin(lon), np.sin(lat)], axis=-1)
    idx = np.arange(n_mesh) + 0.5
    phi = np.arccos(1.0 - 2.0 * idx / n_mesh)
    theta = np.pi * (1.0 + 5.0 ** 0.5) * idx
    mesh_xyz = np.stack(
        [np.cos(theta) * np.sin(phi), np.sin(theta) * np.sin(phi), np.cos(phi)], axis=-1)
    n_grid = grid_xyz.shape[0]

    g2m_s, g2m_r, g2m_attr = _knn_edges(grid_xyz, mesh_xyz, k=4)
    m2g_s, m2g_r, m2g_attr = _knn_edges(mesh_xyz, grid_xyz, k=3)
    km_s, km_r, _ = _knn_edges(mesh_xyz, mesh_xyz, k=8)

    adj = np.zeros((n_mesh, n_mesh), np.float32)
    adj[km_r, km_s] = 1.0
    np.fill_diagonal(adj, 1.0)

    # per-graph one-hot aggregation matrices (reused across batch inside kernels)
    g2m_agg = np.zeros((n_mesh, g2m_s.shape[0]), np.float32)
    g2m_agg[g2m_r, np.arange(g2m_s.shape[0])] = 1.0
    m2g_agg = np.zeros((n_grid, m2g_s.shape[0]), np.float32)
    m2g_agg[m2g_r, np.arange(m2g_s.shape[0])] = 1.0

    return dict(
        n_grid=n_grid,
        grid_static=grid_xyz.astype(np.float32),
        mesh_static=mesh_xyz.astype(np.float32),
        g2m=(g2m_s, g2m_r, g2m_attr),
        m2g=(m2g_s, m2g_r, m2g_attr),
        g2m_agg=g2m_agg,
        m2g_agg=m2g_agg,
        mesh_adj=adj,
    )


# --------------------------------- Model ------------------------------------

class FunctionalGenerativeNetworkPallas:
    def __init__(self, grid_lon, grid_lat, input_features_dim, output_features_dim,
                 noise_dimension, hidden_dims=(32, 32), num_blocks=2, num_heads=4,
                 n_mesh_nodes=64, scale_factor=1.0, seed=0):
        self.num_lon = len(grid_lon)
        self.num_lat = len(grid_lat)
        self.input_features_dim = input_features_dim
        self.output_features_dim = output_features_dim
        self.noise_dimension = noise_dimension
        self.num_heads = num_heads
        self.num_blocks = num_blocks
        self.scale_factor = float(scale_factor)

        latent = hidden_dims[-1]
        hidden = hidden_dims[0]
        self.latent = latent
        self.head_dim = latent // num_heads
        node_static_dim = 3
        edge_dim = 4

        gb = _build_synthetic_graphs(np.asarray(grid_lon, np.float64),
                                     np.asarray(grid_lat, np.float64), n_mesh_nodes)
        self.n_grid = gb["n_grid"]
        self.n_mesh = n_mesh_nodes
        self.grid_static = jnp.asarray(gb["grid_static"])
        self.mesh_static = jnp.asarray(gb["mesh_static"])
        g2m_s, g2m_r, g2m_attr = gb["g2m"]
        m2g_s, m2g_r, m2g_attr = gb["m2g"]
        self.g2m_senders = jnp.asarray(g2m_s)
        self.g2m_receivers = jnp.asarray(g2m_r)
        self.g2m_edge_attr = jnp.asarray(g2m_attr)
        self.m2g_senders = jnp.asarray(m2g_s)
        self.m2g_receivers = jnp.asarray(m2g_r)
        self.m2g_edge_attr = jnp.asarray(m2g_attr)
        self.g2m_agg = jnp.asarray(gb["g2m_agg"])
        self.m2g_agg = jnp.asarray(gb["m2g_agg"])
        self.mesh_adj = jnp.asarray(gb["mesh_adj"])

        key = jax.random.PRNGKey(seed)
        keys = jax.random.split(key, 16 + num_blocks)
        p = {}
        p["enc_grid_embed"] = init_mlp(keys[0], input_features_dim + node_static_dim, hidden, latent)
        p["enc_mesh_embed"] = init_mlp(keys[1], node_static_dim, hidden, latent)
        p["enc_edge_embed"] = init_mlp(keys[2], edge_dim, hidden, latent)
        p["enc_edge_msg"] = init_mlp(keys[3], 3 * latent, hidden, latent)
        p["enc_mesh_update"] = init_mlp(keys[4], 2 * latent, hidden, latent)
        p["enc_grid_update"] = init_mlp(keys[5], latent, hidden, latent)
        p["noise_embed"] = init_mlp(keys[6], noise_dimension, hidden, latent, use_ln=False)
        p["dec_edge_embed"] = init_mlp(keys[7], edge_dim, hidden, latent)
        p["dec_edge_msg"] = init_mlp(keys[8], 3 * latent, hidden, latent)
        p["dec_grid_update"] = init_mlp(keys[9], 2 * latent, hidden, latent)
        p["dec_output"] = init_mlp(keys[10], latent, hidden, output_features_dim, use_ln=False)

        blocks = []
        for i in range(num_blocks):
            bk = jax.random.split(keys[16 + i], 5)
            mod_w, mod_b = init_linear(bk[0], latent, 4 * latent)
            qkv_w, qkv_b = init_linear(bk[1], latent, 3 * latent)
            out_w, out_b = init_linear(bk[2], latent, latent)
            m1w, m1b = init_linear(bk[3], latent, hidden)
            m2w, m2b = init_linear(bk[4], hidden, latent)
            blocks.append(dict(mod_w=mod_w, mod_b=mod_b, qkv_w=qkv_w, qkv_b=qkv_b,
                               out_w=out_w, out_b=out_b,
                               mlp_w1=m1w, mlp_b1=m1b, mlp_w2=m2w, mlp_b2=m2b))
        # stacked block weights -> one fused processor kernel walks all blocks in VMEM
        self.blk = {k: jnp.stack([bb[k] for bb in blocks]) for k in blocks[0]}
        self.p = p

        # static embeddings depend only on (frozen) params + graph: precompute once
        self.mesh_emb = pallas_mlp(self.mesh_static, p["enc_mesh_embed"])
        self.g2m_e_emb = pallas_mlp(self.g2m_edge_attr, p["enc_edge_embed"])
        self.m2g_e_emb = pallas_mlp(self.m2g_edge_attr, p["dec_edge_embed"])

        self._forward_jit = jax.jit(self._forward_impl)

    # ------------------------------ Forward (jitted) -------------------------
    def _forward_impl(self, grid_feats, noise):
        # grid_feats: (b, n_grid, f)   noise: (b, num_ensemble, noise_dim)
        b = grid_feats.shape[0]
        ens = noise.shape[1]
        d = self.latent

        # ---- Encoder (noise-independent: run once, hoisted out of the loop) ----
        gstat = jnp.broadcast_to(self.grid_static[None], (b, self.n_grid, 3))
        grid_in = jnp.concatenate([grid_feats, gstat], axis=-1).reshape(b * self.n_grid, -1)
        grid_emb, grid_lat = run_grid_encoder(
            grid_in, self.p["enc_grid_embed"], self.p["enc_grid_update"])
        grid_emb = grid_emb.reshape(b, self.n_grid, d)
        grid_lat = grid_lat.reshape(b, self.n_grid, d)

        e1 = self.g2m_e_emb.shape[0]
        msg_in = jnp.concatenate([
            jnp.broadcast_to(self.g2m_e_emb[None], (b, e1, d)),
            jnp.take(grid_emb, self.g2m_senders, axis=1),
            jnp.broadcast_to(jnp.take(self.mesh_emb, self.g2m_receivers, axis=0)[None],
                             (b, e1, d)),
        ], axis=-1)
        mesh_lat = run_g2m_encoder(msg_in, self.g2m_agg, self.mesh_emb,
                                   self.p["enc_edge_msg"], self.p["enc_mesh_update"],
                                   self.scale_factor)                 # (b, n_mesh, d)

        # ---- Processor (ensemble folded into batch; one fused kernel) ----------
        mesh_e = jnp.broadcast_to(mesh_lat[:, None], (b, ens, self.n_mesh, d)
                                  ).reshape(b * ens, self.n_mesh, d)
        noise_e = noise.reshape(b * ens, 1, self.noise_dimension)
        mesh_out = run_processor(mesh_e, noise_e, self.mesh_adj, self.p["noise_embed"],
                                 self.blk, num_blocks=self.num_blocks,
                                 num_heads=self.num_heads, head_dim=self.head_dim)

        # ---- Decoder -----------------------------------------------------------
        grid_lat_e = jnp.broadcast_to(grid_lat[:, None], (b, ens, self.n_grid, d)
                                      ).reshape(b * ens, self.n_grid, d)
        e2 = self.m2g_e_emb.shape[0]
        msg2 = jnp.concatenate([
            jnp.broadcast_to(self.m2g_e_emb[None], (b * ens, e2, d)),
            jnp.take(mesh_out, self.m2g_senders, axis=1),
            jnp.take(grid_lat_e, self.m2g_receivers, axis=1),
        ], axis=-1)
        out = run_m2g_decoder(msg2, grid_lat_e, self.m2g_agg,
                              self.p["dec_edge_msg"], self.p["dec_grid_update"],
                              self.p["dec_output"])                   # (b*ens, n_grid, fo)
        return out.reshape(b, ens, self.num_lon, self.num_lat, self.output_features_dim)

    def forward(self, previous_weather_state, num_ensemble=2, key=None):
        if key is None:
            key = jax.random.PRNGKey(123)
        b, nlon, nlat, f = previous_weather_state.shape
        grid_feats = previous_weather_state.reshape(b, nlon * nlat, f).astype(jnp.float32)
        noise = jax.random.normal(key, (b, num_ensemble, self.noise_dimension), jnp.float32)
        return self._forward_jit(grid_feats, noise)


# --------------------------------- Main --------------------------------------

if __name__ == "__main__":
    key = jax.random.PRNGKey(0)
    grid_lon = np.linspace(0.0, 360.0, 16, endpoint=False)
    grid_lat = np.linspace(-80.0, 80.0, 8)

    model = FunctionalGenerativeNetworkPallas(
        grid_lon=grid_lon,
        grid_lat=grid_lat,
        input_features_dim=4,
        output_features_dim=4,
        noise_dimension=8,
        hidden_dims=(32, 32),
        num_blocks=2,
        num_heads=4,
        n_mesh_nodes=64,
        scale_factor=1.0,
        seed=0,
    )

    x = jax.random.normal(key, (2, 16, 8, 4), jnp.float32)  # (b, lon, lat, f)
    out = model.forward(x, num_ensemble=2, key=jax.random.PRNGKey(42))
    out = jax.block_until_ready(out)

    assert out.shape == (2, 2, 16, 8, 4), out.shape
    assert bool(jnp.all(jnp.isfinite(out)))
    print("KERNEL_OK")
</pallas_src>

<mosaic_0001>
module attributes {stable_mosaic.version = 11 : i64} {
  func.func @_mlp_kernel(%arg0: i32, %arg1: memref<64x3xf32, #tpu.memory_space<vmem>>, %arg2: memref<3x32xf32, #tpu.memory_space<vmem>>, %arg3: memref<1x32xf32, #tpu.memory_space<vmem>>, %arg4: memref<32x32xf32, #tpu.memory_space<vmem>>, %arg5: memref<1x32xf32, #tpu.memory_space<vmem>>, %arg6: memref<1x32xf32, #tpu.memory_space<vmem>>, %arg7: memref<1x32xf32, #tpu.memory_space<vmem>>, %arg8: memref<64x32xf32, #tpu.memory_space<vmem>>) attributes {dimension_semantics = [#tpu.dimension_semantics<parallel>], iteration_bounds = array<i64: 1>, scalar_prefetch = 0 : i64, scratch_operands = 0 : i64, tpu.core_type = #tpu.core_type<tc>, window_params = [{pipeline_mode = #tpu.pipeline_mode<synchronous>, transform_indices = @transform_0, window_bounds = array<i64: 64, 3>}, {pipeline_mode = #tpu.pipeline_mode<synchronous>, transform_indices = @transform_1, window_bounds = array<i64: 3, 32>}, {pipeline_mode = #tpu.pipeline_mode<synchronous>, transform_indices = @transform_2, window_bounds = array<i64: 1, 32>}, {pipeline_mode = #tpu.pipeline_mode<synchronous>, transform_indices = @transform_3, window_bounds = array<i64: 32, 32>}, {pipeline_mode = #tpu.pipeline_mode<synchronous>, transform_indices = @transform_4, window_bounds = array<i64: 1, 32>}, {pipeline_mode = #tpu.pipeline_mode<synchronous>, transform_indices = @transform_5, window_bounds = array<i64: 1, 32>}, {pipeline_mode = #tpu.pipeline_mode<synchronous>, transform_indices = @transform_6, window_bounds = array<i64: 1, 32>}, {pipeline_mode = #tpu.pipeline_mode<synchronous>, transform_indices = @transform_7, window_bounds = array<i64: 64, 32>}]} {
    %c0 = arith.constant 0 : index
    %c0_0 = arith.constant 0 : index
    %0 = vector.load %arg2[%c0, %c0_0] : memref<3x32xf32, #tpu.memory_space<vmem>>, vector<3x32xf32>
    %c0_1 = arith.constant 0 : index
    %c0_2 = arith.constant 0 : index
    %1 = vector.load %arg3[%c0_1, %c0_2] : memref<1x32xf32, #tpu.memory_space<vmem>>, vector<1x32xf32>
    %c0_3 = arith.constant 0 : index
    %c0_4 = arith.constant 0 : index
    %2 = vector.load %arg4[%c0_3, %c0_4] : memref<32x32xf32, #tpu.memory_space<vmem>>, vector<32x32xf32>
    %c0_5 = arith.constant 0 : index
    %c0_6 = arith.constant 0 : index
    %3 = vector.load %arg5[%c0_5, %c0_6] : memref<1x32xf32, #tpu.memory_space<vmem>>, vector<1x32xf32>
    %c0_7 = arith.constant 0 : index
    %c0_8 = arith.constant 0 : index
    %4 = vector.load %arg6[%c0_7, %c0_8] : memref<1x32xf32, #tpu.memory_space<vmem>>, vector<1x32xf32>
    %c0_9 = arith.constant 0 : index
    %c0_10 = arith.constant 0 : index
    %5 = vector.load %arg7[%c0_9, %c0_10] : memref<1x32xf32, #tpu.memory_space<vmem>>, vector<1x32xf32>
    %c0_11 = arith.constant 0 : index
    %c0_12 = arith.constant 0 : index
    %6 = vector.load %arg1[%c0_11, %c0_12] : memref<64x3xf32, #tpu.memory_space<vmem>>, vector<64x3xf32>
    %7 = arith.truncf %6 : vector<64x3xf32> to vector<64x3xbf16>
    %8 = arith.truncf %0 : vector<3x32xf32> to vector<3x32xbf16>
    %cst = arith.constant dense<0.000000e+00> : vector<64x32xf32>
    %9 = tpu.matmul %7, %8, %cst {dimension_numbers = #tpu.dot_dimension_numbers<[1], [0], [0], [1], [0, 0, 1, 1], [], []>} : vector<64x3xbf16>, vector<3x32xbf16>, vector<64x32xf32> -> vector<64x32xf32>
    %10 = vector.broadcast %1 : vector<1x32xf32> to vector<64x32xf32>
    %11 = arith.addf %9, %10 : vector<64x32xf32>
    %12 = arith.negf %11 : vector<64x32xf32>
    %13 = math.exp %12 : vector<64x32xf32>
    %cst_13 = arith.constant 1.000000e+00 : f32
    %14 = vector.broadcast %cst_13 : f32 to vector<64x32xf32>
    %15 = arith.addf %14, %13 : vector<64x32xf32>
    %16 = arith.divf %14, %15 : vector<64x32xf32>
    %17 = arith.mulf %11, %16 : vector<64x32xf32>
    %18 = arith.truncf %17 : vector<64x32xf32> to vector<64x32xbf16>
    %19 = arith.truncf %2 : vector<32x32xf32> to vector<32x32xbf16>
    %cst_14 = arith.constant dense<0.000000e+00> : vector<64x32xf32>
    %20 = tpu.matmul %18, %19, %cst_14 {dimension_numbers = #tpu.dot_dimension_numbers<[1], [0], [0], [1], [0, 0, 1, 1], [], []>} : vector<64x32xbf16>, vector<32x32xbf16>, vector<64x32xf32> -> vector<64x32xf32>
    %21 = vector.broadcast %3 : vector<1x32xf32> to vector<64x32xf32>
    %22 = arith.addf %20, %21 : vector<64x32xf32>
    %cst_15 = arith.constant dense<0.000000e+00> : vector<64xf32>
    %23 = vector.multi_reduction <add>, %22, %cst_15 [1] : vector<64x32xf32> to vector<64xf32>
    %24 = vector.shape_cast %23 : vector<64xf32> to vector<64x1xf32>
    %cst_16 = arith.constant 3.200000e+01 : f32
    %25 = vector.broadcast %cst_16 : f32 to vector<64x1xf32>
    %26 = arith.divf %24, %25 : vector<64x1xf32>
    %27 = vector.broadcast %26 : vector<64x1xf32> to vector<64x32xf32>
    %28 = arith.subf %22, %27 : vector<64x32xf32>
    %29 = arith.mulf %28, %28 : vector<64x32xf32>
    %cst_17 = arith.constant dense<0.000000e+00> : vector<64xf32>
    %30 = vector.multi_reduction <add>, %29, %cst_17 [1] : vector<64x32xf32> to vector<64xf32>
    %31 = vector.shape_cast %30 : vector<64xf32> to vector<64x1xf32>
    %cst_18 = arith.constant 3.200000e+01 : f32
    %32 = vector.broadcast %cst_18 : f32 to vector<64x1xf32>
    %33 = arith.divf %31, %32 : vector<64x1xf32>
    %34 = vector.broadcast %26 : vector<64x1xf32> to vector<64x32xf32>
    %35 = arith.subf %22, %34 : vector<64x32xf32>
    %cst_19 = arith.constant 9.99999974E-6 : f32
    %36 = vector.broadcast %cst_19 : f32 to vector<64x1xf32>
    %37 = arith.addf %33, %36 : vector<64x1xf32>
    %38 = math.rsqrt %37 : vector<64x1xf32>
    %39 = vector.broadcast %38 : vector<64x1xf32> to vector<64x32xf32>
    %40 = arith.mulf %35, %39 : vector<64x32xf32>
    %41 = vector.broadcast %4 : vector<1x32xf32> to vector<64x32xf32>
    %42 = arith.mulf %40, %41 : vector<64x32xf32>
    %43 = vector.broadcast %5 : vector<1x32xf32> to vector<64x32xf32>
    %44 = arith.addf %42, %43 : vector<64x32xf32>
    %c0_20 = arith.constant 0 : index
    %c0_21 = arith.constant 0 : index
    %45 = vector.load %arg8[%c0_20, %c0_21] : memref<64x32xf32, #tpu.memory_space<vmem>>, vector<64x32xf32>
    tpu.vector_store %arg8[%c0_20, %c0_21], %44 {strides = array<i32>} : memref<64x32xf32, #tpu.memory_space<vmem>>, vector<64x32xf32>,
    return
  }
  func.func @transform_0(%arg0: i32) -> (i32, i32) {
    %c0_i32 = arith.constant 0 : i32
    %c0_i32_0 = arith.constant 0 : i32
    %c0_i32_1 = arith.constant 0 : i32
    return %c0_i32, %c0_i32_0 : i32, i32
  }
  func.func @transform_1(%arg0: i32) -> (i32, i32) {
    %c0_i32 = arith.constant 0 : i32
    %c0_i32_0 = arith.constant 0 : i32
    %c0_i32_1 = arith.constant 0 : i32
    return %c0_i32, %c0_i32_0 : i32, i32
  }
  func.func @transform_2(%arg0: i32) -> (i32, i32) {
    %c0_i32 = arith.constant 0 : i32
    %c0_i32_0 = arith.constant 0 : i32
    %c0_i32_1 = arith.constant 0 : i32
    return %c0_i32, %c0_i32_0 : i32, i32
  }
  func.func @transform_3(%arg0: i32) -> (i32, i32) {
    %c0_i32 = arith.constant 0 : i32
    %c0_i32_0 = arith.constant 0 : i32
    %c0_i32_1 = arith.constant 0 : i32
    return %c0_i32, %c0_i32_0 : i32, i32
  }
  func.func @transform_4(%arg0: i32) -> (i32, i32) {
    %c0_i32 = arith.constant 0 : i32
    %c0_i32_0 = arith.constant 0 : i32
    %c0_i32_1 = arith.constant 0 : i32
    return %c0_i32, %c0_i32_0 : i32, i32
  }
  func.func @transform_5(%arg0: i32) -> (i32, i32) {
    %c0_i32 = arith.constant 0 : i32
    %c0_i32_0 = arith.constant 0 : i32
    %c0_i32_1 = arith.constant 0 : i32
    return %c0_i32, %c0_i32_0 : i32, i32
  }
  func.func @transform_6(%arg0: i32) -> (i32, i32) {
    %c0_i32 = arith.constant 0 : i32
    %c0_i32_0 = arith.constant 0 : i32
    %c0_i32_1 = arith.constant 0 : i32
    return %c0_i32, %c0_i32_0 : i32, i32
  }
  func.func @transform_7(%arg0: i32) -> (i32, i32) {
    %c0_i32 = arith.constant 0 : i32
    %c0_i32_0 = arith.constant 0 : i32
    %c0_i32_1 = arith.constant 0 : i32
    return %c0_i32, %c0_i32_0 : i32, i32
  }
}

</mosaic_0001>

<llo_original>
// kernel: tpu_custom_call.1
$region0: #{tpu_custom_call.1}
  #allocation0 [shape = 'u32[]', space=smem, size = 0x4, offset = 0x4, fixed_abs, tag = 'smem constant byte address 0x4 - core index']
  #allocation1 [shape = 'u32[144,128]{1,0:T(1,128)}', space=vmem, size = 0x12000, scoped, tag = 'internal scratch']
  %s0 = inlined_call_operand.vmem [shape: f32[64,3], index: 0, kind: input, shape index: {}]
  %s1 = inlined_call_operand.vmem [shape: f32[3,32], index: 1, kind: input, shape index: {}]
  %s2 = inlined_call_operand.vmem [shape: f32[1,32], index: 2, kind: input, shape index: {}]
  %s3 = inlined_call_operand.vmem [shape: f32[32,32], index: 3, kind: input, shape index: {}]
  %s4 = inlined_call_operand.vmem [shape: f32[1,32], index: 4, kind: input, shape index: {}]
  %s5 = inlined_call_operand.vmem [shape: f32[1,32], index: 5, kind: input, shape index: {}]
  %s6 = inlined_call_operand.vmem [shape: f32[1,32], index: 6, kind: input, shape index: {}]
  %s7 = inlined_call_operand.vmem [shape: f32[64,32], index: 7, kind: output, shape index: {}]
  %s8 = sld [smem:[#allocation0]]
  $region38: #{tpu_custom_call.1} parent=0
    _
  %s10 = ssub.s32 1, %s8
  %s11 = scalar_select 0, %s10, %s8
  // Predicated region
  $region2: #{tpu_custom_call.1} parent=0 // pred_check
    _
  $region3: #{tpu_custom_call.1} parent=0 // pred_check_branch
    %13 = sbr.rel (0) target = $region5
  $region4: #{tpu_custom_call.1} parent=0 // pred_region
    _
  $region5: #{tpu_custom_call.1} parent=0 // pred_fallthru
    _
  // Predicated region
  $region6: #{tpu_custom_call.1} parent=0 // pred_check
    _
  $region7: #{tpu_custom_call.1} parent=0 // pred_check_branch
    %15 = sbr.rel (0) target = $region9
  $region8: #{tpu_custom_call.1} parent=0 // pred_region
    _
  $region9: #{tpu_custom_call.1} parent=0 // pred_fallthru
    _
  // Predicated region
  $region10: #{tpu_custom_call.1} parent=0 // pred_check
    _
  $region11: #{tpu_custom_call.1} parent=0 // pred_check_branch
    %17 = sbr.rel (0) target = $region13
  $region12: #{tpu_custom_call.1} parent=0 // pred_region
    _
  $region13: #{tpu_custom_call.1} parent=0 // pred_fallthru
    _
  // Predicated region
  $region14: #{tpu_custom_call.1} parent=0 // pred_check
    _
  $region15: #{tpu_custom_call.1} parent=0 // pred_check_branch
    %19 = sbr.rel (0) target = $region17
  $region16: #{tpu_custom_call.1} parent=0 // pred_region
    _
  $region17: #{tpu_custom_call.1} parent=0 // pred_fallthru
    _
  // Predicated region
  $region18: #{tpu_custom_call.1} parent=0 // pred_check
    _
  $region19: #{tpu_custom_call.1} parent=0 // pred_check_branch
    %21 = sbr.rel (0) target = $region21
  $region20: #{tpu_custom_call.1} parent=0 // pred_region
    _
  $region21: #{tpu_custom_call.1} parent=0 // pred_fallthru
    _
  // Predicated region
  $region22: #{tpu_custom_call.1} parent=0 // pred_check
    _
  $region23: #{tpu_custom_call.1} parent=0 // pred_check_branch
    %23 = sbr.rel (0) target = $region25
  $region24: #{tpu_custom_call.1} parent=0 // pred_region
    _
  $region25: #{tpu_custom_call.1} parent=0 // pred_fallthru
    _
  // Predicated region
  $region26: #{tpu_custom_call.1} parent=0 // pred_check
    _
  $region27: #{tpu_custom_call.1} parent=0 // pred_check_branch
    %25 = sbr.rel (0) target = $region29
  $region28: #{tpu_custom_call.1} parent=0 // pred_region
    _
  $region29: #{tpu_custom_call.1} parent=0 // pred_fallthru
    _
  %v27 = vld [vmem:[%s1] sm:$0x7]
  %v28 = vld [vmem:[%s2] sm:$0x1]
  %v29 = vld [vmem:[%s3] sm:$0xff]
  %v30 = vld [vmem:[%s3 + $0x8] sm:$0xff]
  %v31 = vld [vmem:[%s3 + $0x10] sm:$0xff]
  %v32 = vld [vmem:[%s3 + $0x18] sm:$0xff]
  %v33 = vld [vmem:[%s4] sm:$0x1]
  %v34 = vld [vmem:[%s5] sm:$0x1]
  %v35 = vld [vmem:[%s6] sm:$0x1]
  %v36 = vld [vmem:[%s0] sm:$0xff]
  %v37 = vld [vmem:[%s0 + $0x8] sm:$0xff]
  %v38 = vld [vmem:[%s0 + $0x10] sm:$0xff]
  %v39 = vld [vmem:[%s0 + $0x18] sm:$0xff]
  %v40 = vld [vmem:[%s0 + $0x20] sm:$0xff]
  %v41 = vld [vmem:[%s0 + $0x28] sm:$0xff]
  %v42 = vld [vmem:[%s0 + $0x30] sm:$0xff]
  %v43 = vld [vmem:[%s0 + $0x38] sm:$0xff]
  %v44 = vpack.c.bf16 %v37, %v36
  %v45 = vpack.c.bf16 %v39, %v38
  %v46 = vpack.c.bf16 %v41, %v40
  %v47 = vpack.c.bf16 %v43, %v42
  %v48 = vpack.c.bf16 %v27, %v27
  %v50 = vlaneseq
  %v51 = vshrl.u32 %v50, 7
  %v52 = vsub.s32 0, %v51
  %v53 = vrot.slane %v28, %v52
  %vm55 = vcmask 23552
  %v57 = vsel %vm55, %v44, 0
  %v60 = vsel %vm55, %v45, 0
  %v63 = vsel %vm55, %v46, 0
  %v66 = vsel %vm55, %v47, 0
  %vm68 = vcmask 1040384
  %vm69 = vcmask 1041408
  %v70 = vsel %vm68, 4294967295, 65535
  %v71 = vsel %vm69, %v70, 0
  %v73 = vand.u32 %v48, %v71
  %75 = vmatprep.subr.bf16.mxu0 0
  %76 = vmatpush1.bf16.msra.mxu0 %v73
  %77 = vmatprep.subr.bf16.mxu0 0
  %78 = vmatpush1.bf16.msra.mxu0 0
  %79 = vmatprep.subr.bf16.mxu0 0
  %80 = vmatpush1.bf16.msra.mxu0 0
  %81 = vmatprep.subr.bf16.mxu0 0
  %82 = vmatpush1.bf16.msra.mxu0 0
  %83 = vmatprep.subr.bf16.mxu0 0
  %84 = vmatpush1.bf16.msra.mxu0 0
  %85 = vmatprep.subr.bf16.mxu0 0
  %86 = vmatpush1.bf16.msra.mxu0 0
  %87 = vmatprep.subr.bf16.mxu0 0
  %88 = vmatpush1.bf16.msra.mxu0 0
  %89 = vmatprep.subr.bf16.mxu0 0
  %90 = vmatpush1.bf16.msra.mxu0 0
  %91 = vmatprep.subr.bf16.mxu0 0
  %92 = vmatpush1.bf16.msra.mxu0 0
  %93 = vmatprep.subr.bf16.mxu0 0
  %94 = vmatpush1.bf16.msra.mxu0 0
  %95 = vmatprep.subr.bf16.mxu0 0
  %96 = vmatpush1.bf16.msra.mxu0 0
  %97 = vmatprep.subr.bf16.mxu0 0
  %98 = vmatpush1.bf16.msra.mxu0 0
  %99 = vmatprep.subr.bf16.mxu0 0
  %100 = vmatpush1.bf16.msra.mxu0 0
  %101 = vmatprep.subr.bf16.mxu0 0
  %102 = vmatpush1.bf16.msra.mxu0 0
  %103 = vmatprep.subr.bf16.mxu0 0
  %104 = vmatpush1.bf16.msra.mxu0 0
  %105 = vmatprep.subr.bf16.mxu0 0
  %106 = vmatpush1.bf16.msra.mxu0 0
  %107 = vmatprep.mubr.bf16.mxu0 0
  %108 = vmatmul.mubr.bf16.gmra.mrb[0].mxu0 %v57
  %v109 = vpop.f32.mrb[0].mxu0
  %v110 = vadd.f32 %v53, %v109
  %v111 = vpop.f32.mrb[0].mxu0
  %v112 = vpop.f32.mrb[0].mxu0
  %v113 = vadd.f32 %v53, %v112
  %v114 = vpop.f32.mrb[0].mxu0
  %115 = vmatprep.mubr.bf16.mxu0 0
  %116 = vmatmul.mubr.bf16.gmra.mrb[0].mxu0 %v60
  %v117 = vpop.f32.mrb[0].mxu0
  %v118 = vadd.f32 %v53, %v117
  %v119 = vpop.f32.mrb[0].mxu0
  %v120 = vpop.f32.mrb[0].mxu0
  %v121 = vadd.f32 %v53, %v120
  %v122 = vpop.f32.mrb[0].mxu0
  %123 = vmatprep.mubr.bf16.mxu0 0
  %124 = vmatmul.mubr.bf16.gmra.mrb[0].mxu0 %v63
  %v125 = vpop.f32.mrb[0].mxu0
  %v126 = vadd.f32 %v53, %v125
  %v127 = vpop.f32.mrb[0].mxu0
  %v128 = vpop.f32.mrb[0].mxu0
  %v129 = vadd.f32 %v53, %v128
  %v130 = vpop.f32.mrb[0].mxu0
  %131 = vmatprep.mubr.bf16.mxu0 0
  %132 = vmatmul.mubr.bf16.gmra.mrb[0].mxu0 %v66
  %v133 = vpop.f32.mrb[0].mxu0
  %v134 = vadd.f32 %v53, %v133
  %v135 = vpop.f32.mrb[0].mxu0
  %v136 = vpop.f32.mrb[0].mxu0
  %v137 = vadd.f32 %v53, %v136
  %v138 = vpop.f32.mrb[0].mxu0
  %139 = vdwg.mxu0
  %v140 = vxor.u32 %v110, 2147483648
  %v141 = vxor.u32 %v113, 2147483648
  %v142 = vxor.u32 %v118, 2147483648
  %v143 = vxor.u32 %v121, 2147483648
  %v144 = vxor.u32 %v126, 2147483648
  %v145 = vxor.u32 %v129, 2147483648
  %v146 = vxor.u32 %v134, 2147483648
  %v147 = vxor.u32 %v137, 2147483648
  %v148 = vmul.f32 %v140, 1.442695
  %v149 = vpow.pop %v148
  %v150 = vmul.f32 %v141, 1.442695
  %v151 = vpow.pop %v150
  %v152 = vmul.f32 %v142, 1.442695
  %v153 = vpow.pop %v152
  %v154 = vmul.f32 %v143, 1.442695
  %v155 = vpow.pop %v154
  %v156 = vmul.f32 %v144, 1.442695
  %v157 = vpow.pop %v156
  %v158 = vmul.f32 %v145, 1.442695
  %v159 = vpow.pop %v158
  %v160 = vmul.f32 %v146, 1.442695
  %v161 = vpow.pop %v160
  %v162 = vmul.f32 %v147, 1.442695
  %v163 = vpow.pop %v162
  %v164 = vadd.f32 %v149, 1.0
  %v165 = vadd.f32 %v151, 1.0
  %v166 = vadd.f32 %v153, 1.0
  %v167 = vadd.f32 %v155, 1.0
  %v168 = vadd.f32 %v157, 1.0
  %v169 = vadd.f32 %v159, 1.0
  %v170 = vadd.f32 %v161, 1.0
  %v171 = vadd.f32 %v163, 1.0
  %v172 = vrcp.pop %v164
  %v173 = vmul.f32 1.0, %v172
  %v174 = vrcp.pop %v165
  %v175 = vmul.f32 1.0, %v174
  %v176 = vrcp.pop %v166
  %v177 = vmul.f32 1.0, %v176
  %v178 = vrcp.pop %v167
  %v179 = vmul.f32 1.0, %v178
  %v180 = vrcp.pop %v168
  %v181 = vmul.f32 1.0, %v180
  %v182 = vrcp.pop %v169
  %v183 = vmul.f32 1.0, %v182
  %v184 = vrcp.pop %v170
  %v185 = vmul.f32 1.0, %v184
  %v186 = vrcp.pop %v171
  %v187 = vmul.f32 1.0, %v186
  %v188 = vmul.f32 %v110, %v173
  %v189 = vmul.f32 %v113, %v175
  %v190 = vmul.f32 %v118, %v177
  %v191 = vmul.f32 %v121, %v179
  %v192 = vmul.f32 %v126, %v181
  %v193 = vmul.f32 %v129, %v183
  %v194 = vmul.f32 %v134, %v185
  %v195 = vmul.f32 %v137, %v187
  %v196 = vpack.c.bf16 %v189, %v188
  %v197 = vpack.c.bf16 %v191, %v190
  %v198 = vpack.c.bf16 %v193, %v192
  %v199 = vpack.c.bf16 %v195, %v194
  %v200 = vpack.c.bf16 %v30, %v29
  %v201 = vpack.c.bf16 %v32, %v31
  %v203 = vlaneseq
  %v204 = vshrl.u32 %v203, 7
  %v205 = vsub.s32 0, %v204
  %v206 = vrot.slane %v33, %v205
  %vm208 = vcmask 261120
  %v210 = vsel %vm208, %v196, 0
  %v213 = vsel %vm208, %v197, 0
  %v216 = vsel %vm208, %v198, 0
  %v219 = vsel %vm208, %v199, 0
  %221 = vmatprep.subr.bf16.mxu0 0
  %222 = vmatpush1.bf16.msra.mxu0 %v200
  %223 = vmatprep.subr.bf16.mxu0 0
  %224 = vmatpush1.bf16.msra.mxu0 %v201
  %225 = vmatprep.subr.bf16.mxu0 0
  %226 = vmatpush1.bf16.msra.mxu0 0
  %227 = vmatprep.subr.bf16.mxu0 0
  %228 = vmatpush1.bf16.msra.mxu0 0
  %229 = vmatprep.subr.bf16.mxu0 0
  %230 = vmatpush1.bf16.msra.mxu0 0
  %231 = vmatprep.subr.bf16.mxu0 0
  %232 = vmatpush1.bf16.msra.mxu0 0
  %233 = vmatprep.subr.bf16.mxu0 0
  %234 = vmatpush1.bf16.msra.mxu0 0
  %235 = vmatprep.subr.bf16.mxu0 0
  %236 = vmatpush1.bf16.msra.mxu0 0
  %237 = vmatprep.subr.bf16.mxu0 0
  %238 = vmatpush1.bf16.msra.mxu0 0
  %239 = vmatprep.subr.bf16.mxu0 0
  %240 = vmatpush1.bf16.msra.mxu0 0
  %241 = vmatprep.subr.bf16.mxu0 0
  %242 = vmatpush1.bf16.msra.mxu0 0
  %243 = vmatprep.subr.bf16.mxu0 0
  %244 = vmatpush1.bf16.msra.mxu0 0
  %245 = vmatprep.subr.bf16.mxu0 0
  %246 = vmatpush1.bf16.msra.mxu0 0
  %247 = vmatprep.subr.bf16.mxu0 0
  %248 = vmatpush1.bf16.msra.mxu0 0
  %249 = vmatprep.subr.bf16.mxu0 0
  %250 = vmatpush1.bf16.msra.mxu0 0
  %251 = vmatprep.subr.bf16.mxu0 0
  %252 = vmatpush1.bf16.msra.mxu0 0
  %253 = vmatprep.mubr.bf16.mxu0 0
  %254 = vmatmul.mubr.bf16.gmra.mrb[0].mxu0 %v210
  %v255 = vpop.f32.mrb[0].mxu0
  %v256 = vadd.f32 %v206, %v255
  %v257 = vpop.f32.mrb[0].mxu0
  %v258 = vpop.f32.mrb[0].mxu0
  %v259 = vadd.f32 %v206, %v258
  %v260 = vpop.f32.mrb[0].mxu0
  %261 = vmatprep.mubr.bf16.mxu0 0
  %262 = vmatmul.mubr.bf16.gmra.mrb[0].mxu0 %v213
  %v263 = vpop.f32.mrb[0].mxu0
  %v264 = vadd.f32 %v206, %v263
  %v265 = vpop.f32.mrb[0].mxu0
  %v266 = vpop.f32.mrb[0].mxu0
  %v267 = vadd.f32 %v206, %v266
  %v268 = vpop.f32.mrb[0].mxu0
  %269 = vmatprep.mubr.bf16.mxu0 0
  %270 = vmatmul.mubr.bf16.gmra.mrb[0].mxu0 %v216
  %v271 = vpop.f32.mrb[0].mxu0
  %v272 = vadd.f32 %v206, %v271
  %v273 = vpop.f32.mrb[0].mxu0
  %v274 = vpop.f32.mrb[0].mxu0
  %v275 = vadd.f32 %v206, %v274
  %v276 = vpop.f32.mrb[0].mxu0
  %277 = vmatprep.mubr.bf16.mxu0 0
  %278 = vmatmul.mubr.bf16.gmra.mrb[0].mxu0 %v219
  %v279 = vpop.f32.mrb[0].mxu0
  %v280 = vadd.f32 %v206, %v279
  %v281 = vpop.f32.mrb[0].mxu0
  %v282 = vpop.f32.mrb[0].mxu0
  %v283 = vadd.f32 %v206, %v282
  %v284 = vpop.f32.mrb[0].mxu0
  %285 = vdwg.mxu0
  %v286 = vsel %vm208, %v256, 0.0
  %287 = vadd.xlane.f32.xlu0 %v286
  %v288 = vpop.xlane.xlu0 %287
  %v289 = vsel %vm208, %v259, 0.0
  %290 = vadd.xlane.f32.xlu0 %v289
  %v291 = vpop.xlane.xlu0 %290
  %v292 = vsel %vm208, %v264, 0.0
  %293 = vadd.xlane.f32.xlu0 %v292
  %v294 = vpop.xlane.xlu0 %293
  %v295 = vsel %vm208, %v267, 0.0
  %296 = vadd.xlane.f32.xlu0 %v295
  %v297 = vpop.xlane.xlu0 %296
  %v298 = vsel %vm208, %v272, 0.0
  %299 = vadd.xlane.f32.xlu0 %v298
  %v300 = vpop.xlane.xlu0 %299
  %v301 = vsel %vm208, %v275, 0.0
  %302 = vadd.xlane.f32.xlu0 %v301
  %v303 = vpop.xlane.xlu0 %302
  %v304 = vsel %vm208, %v280, 0.0
  %305 = vadd.xlane.f32.xlu0 %v304
  %v306 = vpop.xlane.xlu0 %305
  %v307 = vsel %vm208, %v283, 0.0
  %308 = vadd.xlane.f32.xlu0 %v307
  %v309 = vpop.xlane.xlu0 %308
  %v310 = vrcp.pop 32.0
  %v311 = vmul.f32 %v288, %v310
  %v312 = vmul.f32 %v291, %v310
  %v313 = vmul.f32 %v294, %v310
  %v314 = vmul.f32 %v297, %v310
  %v315 = vmul.f32 %v300, %v310
  %v316 = vmul.f32 %v303, %v310
  %v317 = vmul.f32 %v306, %v310
  %v318 = vmul.f32 %v309, %v310
  %v319 = vsub.f32 %v256, %v311
  %v320 = vsub.f32 %v259, %v312
  %v321 = vsub.f32 %v264, %v313
  %v322 = vsub.f32 %v267, %v314
  %v323 = vsub.f32 %v272, %v315
  %v324 = vsub.f32 %v275, %v316
  %v325 = vsub.f32 %v280, %v317
  %v326 = vsub.f32 %v283, %v318
  %v327 = vmul.f32 %v319, %v319
  %v328 = vmul.f32 %v320, %v320
  %v329 = vmul.f32 %v321, %v321
  %v330 = vmul.f32 %v322, %v322
  %v331 = vmul.f32 %v323, %v323
  %v332 = vmul.f32 %v324, %v324
  %v333 = vmul.f32 %v325, %v325
  %v334 = vmul.f32 %v326, %v326
  %v335 = vsel %vm208, %v327, 0.0
  %336 = vadd.xlane.f32.xlu0 %v335
  %v337 = vpop.xlane.xlu0 %336
  %v338 = vsel %vm208, %v328, 0.0
  %339 = vadd.xlane.f32.xlu0 %v338
  %v340 = vpop.xlane.xlu0 %339
  %v341 = vsel %vm208, %v329, 0.0
  %342 = vadd.xlane.f32.xlu0 %v341
  %v343 = vpop.xlane.xlu0 %342
  %v344 = vsel %vm208, %v330, 0.0
  %345 = vadd.xlane.f32.xlu0 %v344
  %v346 = vpop.xlane.xlu0 %345
  %v347 = vsel %vm208, %v331, 0.0
  %348 = vadd.xlane.f32.xlu0 %v347
  %v349 = vpop.xlane.xlu0 %348
  %v350 = vsel %vm208, %v332, 0.0
  %351 = vadd.xlane.f32.xlu0 %v350
  %v352 = vpop.xlane.xlu0 %351
  %v353 = vsel %vm208, %v333, 0.0
  %354 = vadd.xlane.f32.xlu0 %v353
  %v355 = vpop.xlane.xlu0 %354
  %v356 = vsel %vm208, %v334, 0.0
  %357 = vadd.xlane.f32.xlu0 %v356
  %v358 = vpop.xlane.xlu0 %357
  %v359 = vmul.f32 %v337, %v310
  %v360 = vmul.f32 %v340, %v310
  %v361 = vmul.f32 %v343, %v310
  %v362 = vmul.f32 %v346, %v310
  %v363 = vmul.f32 %v349, %v310
  %v364 = vmul.f32 %v352, %v310
  %v365 = vmul.f32 %v355, %v310
  %v366 = vmul.f32 %v358, %v310
  %v367 = vadd.f32 %v359, 1e-05
  %v368 = vadd.f32 %v360, 1e-05
  %v369 = vadd.f32 %v361, 1e-05
  %v370 = vadd.f32 %v362, 1e-05
  %v371 = vadd.f32 %v363, 1e-05
  %v372 = vadd.f32 %v364, 1e-05
  %v373 = vadd.f32 %v365, 1e-05
  %v374 = vadd.f32 %v366, 1e-05
  %v375 = vrsqrt.pop %v367
  %v376 = vrsqrt.pop %v368
  %v377 = vrsqrt.pop %v369
  %v378 = vrsqrt.pop %v370
  %v379 = vrsqrt.pop %v371
  %v380 = vrsqrt.pop %v372
  %v381 = vrsqrt.pop %v373
  %v382 = vrsqrt.pop %v374
  %v383 = vmul.f32 %v319, %v375
  %v384 = vmul.f32 %v320, %v376
  %v385 = vmul.f32 %v321, %v377
  %v386 = vmul.f32 %v322, %v378
  %v387 = vmul.f32 %v323, %v379
  %v388 = vmul.f32 %v324, %v380
  %v389 = vmul.f32 %v325, %v381
  %v390 = vmul.f32 %v326, %v382
  %v392 = vlaneseq
  %v393 = vshrl.u32 %v392, 7
  %v394 = vsub.s32 0, %v393
  %v395 = vrot.slane %v34, %v394
  %v397 = vmul.f32 %v383, %v395
  %v398 = vmul.f32 %v384, %v395
  %v399 = vmul.f32 %v385, %v395
  %v400 = vmul.f32 %v386, %v395
  %v401 = vmul.f32 %v387, %v395
  %v402 = vmul.f32 %v388, %v395
  %v403 = vmul.f32 %v389, %v395
  %v404 = vmul.f32 %v390, %v395
  %v406 = vlaneseq
  %v407 = vshrl.u32 %v406, 7
  %v408 = vsub.s32 0, %v407
  %v409 = vrot.slane %v35, %v408
  %v411 = vadd.f32 %v397, %v409
  %v412 = vadd.f32 %v398, %v409
  %v413 = vadd.f32 %v399, %v409
  %v414 = vadd.f32 %v400, %v409
  %v415 = vadd.f32 %v401, %v409
  %v416 = vadd.f32 %v402, %v409
  %v417 = vadd.f32 %v403, %v409
  %v418 = vadd.f32 %v404, %v409
  %419 = vst.msk [vmem:[%s7] sm:$0xff] %vm208, %v411
  %420 = vst.msk [vmem:[%s7 + $0x8] sm:$0xff] %vm208, %v412
  %421 = vst.msk [vmem:[%s7 + $0x10] sm:$0xff] %vm208, %v413
  %422 = vst.msk [vmem:[%s7 + $0x18] sm:$0xff] %vm208, %v414
  %423 = vst.msk [vmem:[%s7 + $0x20] sm:$0xff] %vm208, %v415
  %424 = vst.msk [vmem:[%s7 + $0x28] sm:$0xff] %vm208, %v416
  %425 = vst.msk [vmem:[%s7 + $0x30] sm:$0xff] %vm208, %v417
  %426 = vst.msk [vmem:[%s7 + $0x38] sm:$0xff] %vm208, %v418
  // Predicated region
  $region30: #{tpu_custom_call.1} parent=0 // pred_check
    _
  $region31: #{tpu_custom_call.1} parent=0 // pred_check_branch
    %428 = sbr.rel (0) target = $region33
  $region32: #{tpu_custom_call.1} parent=0 // pred_region
    _
  $region33: #{tpu_custom_call.1} parent=0 // pred_fallthru
    _
  // Predicated region
  $region34: #{tpu_custom_call.1} parent=0 // pred_check
    _
  $region35: #{tpu_custom_call.1} parent=0 // pred_check_branch
    %430 = sbr.rel (0) target = $region37
  $region36: #{tpu_custom_call.1} parent=0 // pred_region
    _
  $region37: #{tpu_custom_call.1} parent=0 // pred_fallthru
    _

</llo_original>
